<compile_context>
chip_gen: v7x
topology: tpu7x:2x2x1
jax: 0.10.0
libtpu: 0.0.40
codegen_flags: <defaults>
</compile_context>

<pallas_src>
import functools

import jax
import jax.numpy as jnp
from jax.experimental import pallas as pl
from jax.experimental.pallas import tpu as pltpu


def _round_up(x, m):
    return (x + m - 1) // m * m


# ---------------------------------------------------------------------------
# Kernel 1: XW = x @ W_gcn  (hoisted out of the A-reduction; bf16 in/out)
# ---------------------------------------------------------------------------
def xw_kernel(x_ref, w_ref, o_ref):
    o_ref[...] = jnp.dot(
        x_ref[...], w_ref[...], preferred_element_type=jnp.float32
    ).astype(o_ref.dtype)


def compute_xw(x_pad_bf16, w_gcn_bf16, *, tile):
    n_pad, f = x_pad_bf16.shape
    h0 = w_gcn_bf16.shape[1]
    return pl.pallas_call(
        xw_kernel,
        out_shape=jax.ShapeDtypeStruct((n_pad, h0), jnp.bfloat16),
        grid=(n_pad // tile,),
        in_specs=[
            pl.BlockSpec((tile, f), lambda i: (i, 0)),
            pl.BlockSpec((f, h0), lambda i: (0, 0)),
        ],
        out_specs=pl.BlockSpec((tile, h0), lambda i: (i, 0)),
        compiler_params=pltpu.CompilerParams(
            dimension_semantics=("parallel",),
        ),
    )(x_pad_bf16, w_gcn_bf16)


# ---------------------------------------------------------------------------
# Kernel 2: tiled  relu(A_hat @ XW + b_gcn) @ W_lin^T + b_lin
#   grid = (row tiles i "parallel", A-column reduction k "arbitrary")
# ---------------------------------------------------------------------------
def gcn_mlp_kernel(a_ref, xw_ref, bg_ref, wl_ref, bl_ref, o_ref, acc_ref,
                   *, tk, xw_resident):
    k = pl.program_id(1)

    @pl.when(k == 0)
    def _():
        acc_ref[...] = jnp.zeros_like(acc_ref)

    if xw_resident:
        # Whole XW lives in VMEM; slice the k-th (tk, h0) chunk (tile-aligned).
        start = pl.multiple_of(k * tk, tk)
        xw_tile = xw_ref[pl.ds(start, tk), :]
    else:
        xw_tile = xw_ref[...]

    # GCN aggregation: accumulate A_tile @ XW_tile (bf16 in, f32 acc on MXU).
    acc_ref[...] += jnp.dot(
        a_ref[...], xw_tile, preferred_element_type=jnp.float32
    )

    @pl.when(k == pl.num_programs(1) - 1)
    def _():
        # Finalize once per row tile: GCN bias + ReLU, then the Linear layer
        # in bf16 (f32 accumulation), bias add in f32, lane-dense store.
        h = jnp.maximum(acc_ref[...] + bg_ref[...], 0.0).astype(jnp.bfloat16)
        out = (
            jnp.dot(h, wl_ref[...], preferred_element_type=jnp.float32)
            + bl_ref[...]
        )
        o_ref[...] = out.astype(o_ref.dtype)


# ---------------------------------------------------------------------------
# Dense symmetric-normalized adjacency with self loops (PyG GCNConv default),
# scattered straight into the padded buffer and cast once (no extra passes).
# ---------------------------------------------------------------------------
def build_norm_adj_padded(edge_index, num_nodes, n_row_pad, n_col_pad,
                          dtype=jnp.bfloat16):
    src = edge_index[0]
    dst = edge_index[1]
    loop = jnp.arange(num_nodes, dtype=edge_index.dtype)
    src = jnp.concatenate([src, loop])
    dst = jnp.concatenate([dst, loop])
    deg = jnp.zeros((num_nodes,), jnp.float32).at[dst].add(1.0)
    dinv_sqrt = jnp.where(deg > 0, jax.lax.rsqrt(deg), 0.0)
    norm = dinv_sqrt[src] * dinv_sqrt[dst]
    # row = target node, col = source node  ->  out = A_hat @ x'
    a = jnp.zeros((n_row_pad, n_col_pad), jnp.float32).at[dst, src].add(norm)
    return a.astype(dtype)


# ---------------------------------------------------------------------------
# Wrapper
# ---------------------------------------------------------------------------
def gcn_mlp_encoder(x, edge_index, w_gcn, b_gcn, w_lin, b_lin,
                    *, tm=512, tk=512):
    """x: [N,F], edge_index: [2,E], w_gcn: [F,H0], b_gcn: [H0],
    w_lin: [H1,H0] (PyTorch Linear layout), b_lin: [H1]."""
    n, f = x.shape
    h0 = w_gcn.shape[1]
    h1 = w_lin.shape[0]

    # ---- tile selection: (8,128)-legal, capped to the problem size; keep at
    # least 2 row blocks when possible so the "parallel" axis can shard across
    # the 2 TensorCores on v7x.
    base = _round_up(n, 128)
    tm = min(tm, base)
    tk = min(tk, base)
    if base // tm < 2 and tm > 128:
        tm = max(128, tm // 2)

    n_row_pad = _round_up(n, tm)   # rows of A padded to tm
    n_col_pad = _round_up(n, tk)   # cols of A (= rows of XW) padded to tk
    h1_pad = _round_up(h1, 128)    # lane-dense output stores (no masked vst)

    # ---- A_hat built directly into the padded bf16 buffer (one f32 scatter,
    # one cast): the dominant HBM stream is never materialized twice.
    a_bf16 = build_norm_adj_padded(edge_index, n, n_row_pad, n_col_pad,
                                   dtype=jnp.bfloat16)

    # ---- operands in the dtypes the MXU wants
    x_pad = jnp.zeros((n_col_pad, f), jnp.bfloat16).at[:n].set(
        x.astype(jnp.bfloat16))
    w_gcn_bf = w_gcn.astype(jnp.bfloat16)
    bg = b_gcn.reshape(1, h0).astype(jnp.float32)
    wl_t = jnp.zeros((h0, h1_pad), jnp.bfloat16).at[:, :h1].set(
        w_lin.T.astype(jnp.bfloat16))
    bl = jnp.zeros((1, h1_pad), jnp.float32).at[:, :h1].set(
        b_lin.reshape(1, h1).astype(jnp.float32))

    # Hoisted XW (one pass over node rows; the reduction loop reuses it).
    xw = compute_xw(x_pad, w_gcn_bf, tile=tk)

    # Keep the whole XW VMEM-resident when it fits comfortably (counting the
    # default double buffer); otherwise stream one (tk, h0) tile per k step.
    xw_resident = (2 * n_col_pad * h0 * 2) <= 12 * 1024 * 1024
    if xw_resident:
        xw_spec = pl.BlockSpec((n_col_pad, h0), lambda i, k: (0, 0))
    else:
        xw_spec = pl.BlockSpec((tk, h0), lambda i, k: (k, 0))

    grid = (n_row_pad // tm, n_col_pad // tk)

    # ---- honest scheduling hints
    flops = 2 * n_row_pad * n_col_pad * h0 + 2 * n_row_pad * h0 * h1_pad
    xw_reads = 1 if xw_resident else grid[0]
    bytes_accessed = (
        a_bf16.size * 2 + xw.size * 2 * xw_reads + wl_t.size * 2
        + bg.size * 4 + bl.size * 4 + n_row_pad * h1_pad * 4
    )

    # VMEM working set: A double-buffered bf16, XW (resident or streamed),
    # constants, double-buffered f32 output, f32 accumulator. <=48 MiB keeps
    # headroom even on v7x (64 MiB physical).
    vmem_need = (
        2 * tm * tk * 2
        + 2 * (n_col_pad if xw_resident else tk) * h0 * 2
        + 2 * (h0 * h1_pad * 2 + h1_pad * 4 + h0 * 4)
        + 2 * tm * h1_pad * 4
        + tm * h0 * 4
    )
    vmem_limit = int(min(48 * 1024 * 1024,
                         max(32 * 1024 * 1024, 2 * vmem_need)))

    kernel = functools.partial(gcn_mlp_kernel, tk=tk, xw_resident=xw_resident)

    out_pad = pl.pallas_call(
        kernel,
        out_shape=jax.ShapeDtypeStruct((n_row_pad, h1_pad), jnp.float32),
        grid_spec=pltpu.PrefetchScalarGridSpec(
            num_scalar_prefetch=0,
            grid=grid,
            in_specs=[
                pl.BlockSpec((tm, tk), lambda i, k: (i, k)),      # A_hat tile
                xw_spec,                                          # XW
                pl.BlockSpec((1, h0), lambda i, k: (0, 0)),       # b_gcn
                pl.BlockSpec((h0, h1_pad), lambda i, k: (0, 0)),  # W_lin^T bf16
                pl.BlockSpec((1, h1_pad), lambda i, k: (0, 0)),   # b_lin
            ],
            out_specs=pl.BlockSpec((tm, h1_pad), lambda i, k: (i, 0)),
            scratch_shapes=[pltpu.VMEM((tm, h0), jnp.float32)],
        ),
        compiler_params=pltpu.CompilerParams(
            dimension_semantics=("parallel", "arbitrary"),
            vmem_limit_bytes=vmem_limit,
        ),
        cost_estimate=pl.CostEstimate(
            flops=int(flops), transcendentals=0,
            bytes_accessed=int(bytes_accessed),
        ),
    )(a_bf16, xw, bg, wl_t, bl)

    return out_pad[:n, :h1]


# ---------------------------------------------------------------------------
# Main
# ---------------------------------------------------------------------------
if __name__ == "__main__":
    key = jax.random.PRNGKey(0)
    k_x, k_wg, k_wl, k_bl = jax.random.split(key, 4)

    # Small but tile-exercising shapes.
    N = 256
    IN_FEATURES = 32
    HIDDEN_DIMS = (128, 32)

    # Node features [N, in_features]
    x = jax.random.normal(k_x, (N, IN_FEATURES), dtype=jnp.float32)

    # Deterministic graph: bidirectional ring, edge_index [2, E]
    src = jnp.arange(N, dtype=jnp.int32)
    dst = (src + 1) % N
    edge_index = jnp.stack(
        [jnp.concatenate([src, dst]), jnp.concatenate([dst, src])], axis=0
    )

    # Synthetic parameters matching the module's layer shapes:
    #   GCNConv(in -> h0): weight [in, h0], bias [h0]
    #   Linear(h0 -> h1):  weight [h1, h0], bias [h1]
    w_gcn = 0.1 * jax.random.normal(k_wg, (IN_FEATURES, HIDDEN_DIMS[0]), jnp.float32)
    b_gcn = jnp.zeros((HIDDEN_DIMS[0],), jnp.float32)
    w_lin = 0.1 * jax.random.normal(k_wl, (HIDDEN_DIMS[1], HIDDEN_DIMS[0]), jnp.float32)
    b_lin = 0.01 * jax.random.normal(k_bl, (HIDDEN_DIMS[1],), jnp.float32)

    out = gcn_mlp_encoder(x, edge_index, w_gcn, b_gcn, w_lin, b_lin)
    out = jax.block_until_ready(out)

    # f32 reference of the module math (the kernel streams A_hat/XW/x/W in
    # bf16 with f32 accumulation, so the tolerance is relaxed vs 1e-5).
    a_hat_f32 = build_norm_adj_padded(edge_index, N, N, N, dtype=jnp.float32)
    ref = (
        jnp.maximum(a_hat_f32 @ (x @ w_gcn) + b_gcn[None, :], 0.0) @ w_lin.T
        + b_lin[None, :]
    )
    assert out.shape == (N, HIDDEN_DIMS[1])
    max_err = float(jnp.max(jnp.abs(out - ref)))
    assert jnp.allclose(out, ref, atol=5e-2, rtol=5e-2), f"max |err| = {max_err}"

    print("KERNEL_OK")
</pallas_src>

<mosaic_0001>
module attributes {stable_mosaic.version = 11 : i64} {
  func.func @xw_kernel(%arg0: i32, %arg1: memref<256x32xbf16, #tpu.memory_space<vmem>>, %arg2: memref<32x128xbf16, #tpu.memory_space<vmem>>, %arg3: memref<256x128xbf16, #tpu.memory_space<vmem>>) attributes {dimension_semantics = [#tpu.dimension_semantics<parallel>], iteration_bounds = array<i64: 1>, scalar_prefetch = 0 : i64, scratch_operands = 0 : i64, tpu.core_type = #tpu.core_type<tc>, window_params = [{transform_indices = @transform_0, window_bounds = array<i64: 256, 32>}, {pipeline_mode = #tpu.pipeline_mode<synchronous>, transform_indices = @transform_1, window_bounds = array<i64: 32, 128>}, {transform_indices = @transform_2, window_bounds = array<i64: 256, 128>}]} {
    %c0 = arith.constant 0 : index
    %c0_0 = arith.constant 0 : index
    %0 = vector.load %arg1[%c0, %c0_0] : memref<256x32xbf16, #tpu.memory_space<vmem>>, vector<256x32xbf16>
    %c0_1 = arith.constant 0 : index
    %c0_2 = arith.constant 0 : index
    %1 = vector.load %arg2[%c0_1, %c0_2] : memref<32x128xbf16, #tpu.memory_space<vmem>>, vector<32x128xbf16>
    %cst = arith.constant dense<0.000000e+00> : vector<256x128xf32>
    %2 = tpu.matmul %0, %1, %cst {dimension_numbers = #tpu.dot_dimension_numbers<[1], [0], [0], [1], [0, 0, 1, 1], [], []>} : vector<256x32xbf16>, vector<32x128xbf16>, vector<256x128xf32> -> vector<256x128xf32>
    %3 = arith.truncf %2 : vector<256x128xf32> to vector<256x128xbf16>
    %c0_3 = arith.constant 0 : index
    %c0_4 = arith.constant 0 : index
    %4 = vector.load %arg3[%c0_3, %c0_4] : memref<256x128xbf16, #tpu.memory_space<vmem>>, vector<256x128xbf16>
    tpu.vector_store %arg3[%c0_3, %c0_4], %3 {strides = array<i32>} : memref<256x128xbf16, #tpu.memory_space<vmem>>, vector<256x128xbf16>,
    return
  }
  func.func @transform_0(%arg0: i32) -> (i32, i32) {
    %c0_i32 = arith.constant 0 : i32
    %c0_i32_0 = arith.constant 0 : i32
    return %arg0, %c0_i32 : i32, i32
  }
  func.func @transform_1(%arg0: i32) -> (i32, i32) {
    %c0_i32 = arith.constant 0 : i32
    %c0_i32_0 = arith.constant 0 : i32
    %c0_i32_1 = arith.constant 0 : i32
    return %c0_i32, %c0_i32_0 : i32, i32
  }
  func.func @transform_2(%arg0: i32) -> (i32, i32) {
    %c0_i32 = arith.constant 0 : i32
    %c0_i32_0 = arith.constant 0 : i32
    return %arg0, %c0_i32 : i32, i32
  }
}

</mosaic_0001>

<llo_original>
// kernel: tpu_custom_call.1
$region0: #{tpu_custom_call.1}
  #allocation0 [shape = 'u32[]', space=smem, size = 0x4, offset = 0x4, fixed_abs, tag = 'smem constant byte address 0x4 - core index']
  #allocation1 [shape = 'u32[144,128]{1,0:T(1,128)}', space=vmem, size = 0x12000, scoped, tag = 'internal scratch']
  %s0 = inlined_call_operand.vmem [shape: bf16[256,32], index: 0, kind: input, shape index: {}]
  %s1 = inlined_call_operand.vmem [shape: bf16[32,128], index: 1, kind: input, shape index: {}]
  %s2 = inlined_call_operand.hbm [shape: bf16[256,128], index: 2, kind: output, shape index: {}]
  %s3 = sld [smem:[#allocation0]]
  $region18: #{tpu_custom_call.1} parent=0
    _
  %s5 = ssub.s32 1, %s3
  %s6 = scalar_select 0, %s5, %s3
  $region1: #{tpu_custom_call.1} parent=0
    #allocation2 [shape = 'u8[65536]{0}', space=vmem, size = 0x10000, scoped, tag = 'output window, operand 0, single buffered']
    #allocation3 [shape = 's32[1]{0}', space=sflag, size = 0x4, scoped, tag = 'scoped memory for tpu_custom_call.1']
    %7 = vsyncpa [#allocation3], 0
    // Predicated region
    $region2: #{tpu_custom_call.1} parent=1 // pred_check
      _
    $region3: #{tpu_custom_call.1} parent=1 // pred_check_branch
      %9 = sbr.rel (0) target = $region5
    $region4: #{tpu_custom_call.1} parent=1 // pred_region
      _
    $region5: #{tpu_custom_call.1} parent=1 // pred_fallthru
      _
    // Predicated region
    $region6: #{tpu_custom_call.1} parent=1 // pred_check
      _
    $region7: #{tpu_custom_call.1} parent=1 // pred_check_branch
      %11 = sbr.rel (0) target = $region9
    $region8: #{tpu_custom_call.1} parent=1 // pred_region
      _
    $region9: #{tpu_custom_call.1} parent=1 // pred_fallthru
      _
    %v13 = vld [vmem:[%s0] sm:$0xf]
    %v14 = vld [vmem:[%s0 + $0x4] sm:$0xf]
    %v15 = vld [vmem:[%s0 + $0x8] sm:$0xf]
    %v16 = vld [vmem:[%s0 + $0xc] sm:$0xf]
    %v17 = vld [vmem:[%s0 + $0x10] sm:$0xf]
    %v18 = vld [vmem:[%s0 + $0x14] sm:$0xf]
    %v19 = vld [vmem:[%s0 + $0x18] sm:$0xf]
    %v20 = vld [vmem:[%s0 + $0x1c] sm:$0xf]
    %v21 = vld [vmem:[%s0 + $0x20] sm:$0xf]
    %v22 = vld [vmem:[%s0 + $0x24] sm:$0xf]
    %v23 = vld [vmem:[%s0 + $0x28] sm:$0xf]
    %v24 = vld [vmem:[%s0 + $0x2c] sm:$0xf]
    %v25 = vld [vmem:[%s0 + $0x30] sm:$0xf]
    %v26 = vld [vmem:[%s0 + $0x34] sm:$0xf]
    %v27 = vld [vmem:[%s0 + $0x38] sm:$0xf]
    %v28 = vld [vmem:[%s0 + $0x3c] sm:$0xf]
    %v29 = vld [vmem:[%s0 + $0x40] sm:$0xf]
    %v30 = vld [vmem:[%s0 + $0x44] sm:$0xf]
    %v31 = vld [vmem:[%s0 + $0x48] sm:$0xf]
    %v32 = vld [vmem:[%s0 + $0x4c] sm:$0xf]
    %v33 = vld [vmem:[%s0 + $0x50] sm:$0xf]
    %v34 = vld [vmem:[%s0 + $0x54] sm:$0xf]
    %v35 = vld [vmem:[%s0 + $0x58] sm:$0xf]
    %v36 = vld [vmem:[%s0 + $0x5c] sm:$0xf]
    %v37 = vld [vmem:[%s0 + $0x60] sm:$0xf]
    %v38 = vld [vmem:[%s0 + $0x64] sm:$0xf]
    %v39 = vld [vmem:[%s0 + $0x68] sm:$0xf]
    %v40 = vld [vmem:[%s0 + $0x6c] sm:$0xf]
    %v41 = vld [vmem:[%s0 + $0x70] sm:$0xf]
    %v42 = vld [vmem:[%s0 + $0x74] sm:$0xf]
    %v43 = vld [vmem:[%s0 + $0x78] sm:$0xf]
    %v44 = vld [vmem:[%s0 + $0x7c] sm:$0xf]
    %v45 = vld [vmem:[%s1] sm:$0xf]
    %v46 = vld [vmem:[%s1 + $0x4] sm:$0xf]
    %v47 = vld [vmem:[%s1 + $0x8] sm:$0xf]
    %v48 = vld [vmem:[%s1 + $0xc] sm:$0xf]
    %v81 = vunpack.c.l.b16 %v13
    %v82 = vunpack.c.l.b16 %v14
    %v83 = vunpack.c.l.b16 %v15
    %v84 = vunpack.c.l.b16 %v16
    %v85 = vunpack.c.l.b16 %v17
    %v86 = vunpack.c.l.b16 %v18
    %v87 = vunpack.c.l.b16 %v19
    %v88 = vunpack.c.l.b16 %v20
    %v89 = vunpack.c.l.b16 %v21
    %v90 = vunpack.c.l.b16 %v22
    %v91 = vunpack.c.l.b16 %v23
    %v92 = vunpack.c.l.b16 %v24
    %v93 = vunpack.c.l.b16 %v25
    %v94 = vunpack.c.l.b16 %v26
    %v95 = vunpack.c.l.b16 %v27
    %v96 = vunpack.c.l.b16 %v28
    %v97 = vunpack.c.l.b16 %v29
    %v98 = vunpack.c.l.b16 %v30
    %v99 = vunpack.c.l.b16 %v31
    %v100 = vunpack.c.l.b16 %v32
    %v101 = vunpack.c.l.b16 %v33
    %v102 = vunpack.c.l.b16 %v34
    %v103 = vunpack.c.l.b16 %v35
    %v104 = vunpack.c.l.b16 %v36
    %v105 = vunpack.c.l.b16 %v37
    %v106 = vunpack.c.l.b16 %v38
    %v107 = vunpack.c.l.b16 %v39
    %v108 = vunpack.c.l.b16 %v40
    %v109 = vunpack.c.l.b16 %v41
    %v110 = vunpack.c.l.b16 %v42
    %v111 = vunpack.c.l.b16 %v43
    %v112 = vunpack.c.l.b16 %v44
    %v113 = vpack.c.b16 %v82, %v81
    %v114 = vpack.c.b16 %v84, %v83
    %v115 = vpack.c.b16 %v86, %v85
    %v116 = vpack.c.b16 %v88, %v87
    %v117 = vpack.c.b16 %v90, %v89
    %v118 = vpack.c.b16 %v92, %v91
    %v119 = vpack.c.b16 %v94, %v93
    %v120 = vpack.c.b16 %v96, %v95
    %v121 = vpack.c.b16 %v98, %v97
    %v122 = vpack.c.b16 %v100, %v99
    %v123 = vpack.c.b16 %v102, %v101
    %v124 = vpack.c.b16 %v104, %v103
    %v125 = vpack.c.b16 %v106, %v105
    %v126 = vpack.c.b16 %v108, %v107
    %v127 = vpack.c.b16 %v110, %v109
    %v128 = vpack.c.b16 %v112, %v111
    %v133 = vunpack.c.l.b16 %v45
    %v134 = vunpack.c.l.b16 %v46
    %v135 = vunpack.c.l.b16 %v47
    %v136 = vunpack.c.l.b16 %v48
    %v137 = vpack.c.b16 %v134, %v133
    %v138 = vpack.c.b16 %v136, %v135
    %vm141 = vcmask 261120
    %v143 = vsel %vm141, %v113, 0
    %v146 = vsel %vm141, %v114, 0
    %v149 = vsel %vm141, %v115, 0
    %v152 = vsel %vm141, %v116, 0
    %v155 = vsel %vm141, %v117, 0
    %v158 = vsel %vm141, %v118, 0
    %v161 = vsel %vm141, %v119, 0
    %v164 = vsel %vm141, %v120, 0
    %v167 = vsel %vm141, %v121, 0
    %v170 = vsel %vm141, %v122, 0
    %v173 = vsel %vm141, %v123, 0
    %v176 = vsel %vm141, %v124, 0
    %v179 = vsel %vm141, %v125, 0
    %v182 = vsel %vm141, %v126, 0
    %v185 = vsel %vm141, %v127, 0
    %v188 = vsel %vm141, %v128, 0
    %190 = vmatprep.subr.bf16.mxu0 0
    %191 = vmatpush1.bf16.msra.mxu0 %v137
    %192 = vmatprep.subr.bf16.mxu0 0
    %193 = vmatpush1.bf16.msra.mxu0 %v138
    %194 = vmatprep.subr.bf16.mxu0 0
    %195 = vmatpush1.bf16.msra.mxu0 0
    %196 = vmatprep.subr.bf16.mxu0 0
    %197 = vmatpush1.bf16.msra.mxu0 0
    %198 = vmatprep.subr.bf16.mxu0 0
    %199 = vmatpush1.bf16.msra.mxu0 0
    %200 = vmatprep.subr.bf16.mxu0 0
    %201 = vmatpush1.bf16.msra.mxu0 0
    %202 = vmatprep.subr.bf16.mxu0 0
    %203 = vmatpush1.bf16.msra.mxu0 0
    %204 = vmatprep.subr.bf16.mxu0 0
    %205 = vmatpush1.bf16.msra.mxu0 0
    %206 = vmatprep.subr.bf16.mxu0 0
    %207 = vmatpush1.bf16.msra.mxu0 0
    %208 = vmatprep.subr.bf16.mxu0 0
    %209 = vmatpush1.bf16.msra.mxu0 0
    %210 = vmatprep.subr.bf16.mxu0 0
    %211 = vmatpush1.bf16.msra.mxu0 0
    %212 = vmatprep.subr.bf16.mxu0 0
    %213 = vmatpush1.bf16.msra.mxu0 0
    %214 = vmatprep.subr.bf16.mxu0 0
    %215 = vmatpush1.bf16.msra.mxu0 0
    %216 = vmatprep.subr.bf16.mxu0 0
    %217 = vmatpush1.bf16.msra.mxu0 0
    %218 = vmatprep.subr.bf16.mxu0 0
    %219 = vmatpush1.bf16.msra.mxu0 0
    %220 = vmatprep.subr.bf16.mxu0 0
    %221 = vmatpush1.bf16.msra.mxu0 0
    %222 = vmatprep.mubr.bf16.mxu0 0
    %223 = vmatmul.mubr.bf16.gmra.mrb[0].mxu0 %v143
    %v224 = vpop.f32.mrb[0].mxu0
    %v225 = vadd.f32 0.0, %v224
    %v226 = vpop.f32.mrb[0].mxu0
    %v227 = vpop.f32.mrb[0].mxu0
    %v228 = vadd.f32 0.0, %v227
    %v229 = vpop.f32.mrb[0].mxu0
    %230 = vmatprep.mubr.bf16.mxu0 0
    %231 = vmatmul.mubr.bf16.gmra.mrb[0].mxu0 %v146
    %v232 = vpop.f32.mrb[0].mxu0
    %v233 = vadd.f32 0.0, %v232
    %v234 = vpop.f32.mrb[0].mxu0
    %v235 = vpop.f32.mrb[0].mxu0
    %v236 = vadd.f32 0.0, %v235
    %v237 = vpop.f32.mrb[0].mxu0
    %238 = vmatprep.mubr.bf16.mxu0 0
    %239 = vmatmul.mubr.bf16.gmra.mrb[0].mxu0 %v149
    %v240 = vpop.f32.mrb[0].mxu0
    %v241 = vadd.f32 0.0, %v240
    %v242 = vpop.f32.mrb[0].mxu0
    %v243 = vpop.f32.mrb[0].mxu0
    %v244 = vadd.f32 0.0, %v243
    %v245 = vpop.f32.mrb[0].mxu0
    %246 = vmatprep.mubr.bf16.mxu0 0
    %247 = vmatmul.mubr.bf16.gmra.mrb[0].mxu0 %v152
    %v248 = vpop.f32.mrb[0].mxu0
    %v249 = vadd.f32 0.0, %v248
    %v250 = vpop.f32.mrb[0].mxu0
    %v251 = vpop.f32.mrb[0].mxu0
    %v252 = vadd.f32 0.0, %v251
    %v253 = vpop.f32.mrb[0].mxu0
    %254 = vmatprep.mubr.bf16.mxu0 0
    %255 = vmatmul.mubr.bf16.gmra.mrb[0].mxu0 %v155
    %v256 = vpop.f32.mrb[0].mxu0
    %v257 = vadd.f32 0.0, %v256
    %v258 = vpop.f32.mrb[0].mxu0
    %v259 = vpop.f32.mrb[0].mxu0
    %v260 = vadd.f32 0.0, %v259
    %v261 = vpop.f32.mrb[0].mxu0
    %262 = vmatprep.mubr.bf16.mxu0 0
    %263 = vmatmul.mubr.bf16.gmra.mrb[0].mxu0 %v158
    %v264 = vpop.f32.mrb[0].mxu0
    %v265 = vadd.f32 0.0, %v264
    %v266 = vpop.f32.mrb[0].mxu0
    %v267 = vpop.f32.mrb[0].mxu0
    %v268 = vadd.f32 0.0, %v267
    %v269 = vpop.f32.mrb[0].mxu0
    %270 = vmatprep.mubr.bf16.mxu0 0
    %271 = vmatmul.mubr.bf16.gmra.mrb[0].mxu0 %v161
    %v272 = vpop.f32.mrb[0].mxu0
    %v273 = vadd.f32 0.0, %v272
    %v274 = vpop.f32.mrb[0].mxu0
    %v275 = vpop.f32.mrb[0].mxu0
    %v276 = vadd.f32 0.0, %v275
    %v277 = vpop.f32.mrb[0].mxu0
    %278 = vmatprep.mubr.bf16.mxu0 0
    %279 = vmatmul.mubr.bf16.gmra.mrb[0].mxu0 %v164
    %v280 = vpop.f32.mrb[0].mxu0
    %v281 = vadd.f32 0.0, %v280
    %v282 = vpop.f32.mrb[0].mxu0
    %v283 = vpop.f32.mrb[0].mxu0
    %v284 = vadd.f32 0.0, %v283
    %v285 = vpop.f32.mrb[0].mxu0
    %286 = vmatprep.mubr.bf16.mxu0 0
    %287 = vmatmul.mubr.bf16.gmra.mrb[0].mxu0 %v167
    %v288 = vpop.f32.mrb[0].mxu0
    %v289 = vadd.f32 0.0, %v288
    %v290 = vpop.f32.mrb[0].mxu0
    %v291 = vpop.f32.mrb[0].mxu0
    %v292 = vadd.f32 0.0, %v291
    %v293 = vpop.f32.mrb[0].mxu0
    %294 = vmatprep.mubr.bf16.mxu0 0
    %295 = vmatmul.mubr.bf16.gmra.mrb[0].mxu0 %v170
    %v296 = vpop.f32.mrb[0].mxu0
    %v297 = vadd.f32 0.0, %v296
    %v298 = vpop.f32.mrb[0].mxu0
    %v299 = vpop.f32.mrb[0].mxu0
    %v300 = vadd.f32 0.0, %v299
    %v301 = vpop.f32.mrb[0].mxu0
    %302 = vmatprep.mubr.bf16.mxu0 0
    %303 = vmatmul.mubr.bf16.gmra.mrb[0].mxu0 %v173
    %v304 = vpop.f32.mrb[0].mxu0
    %v305 = vadd.f32 0.0, %v304
    %v306 = vpop.f32.mrb[0].mxu0
    %v307 = vpop.f32.mrb[0].mxu0
    %v308 = vadd.f32 0.0, %v307
    %v309 = vpop.f32.mrb[0].mxu0
    %310 = vmatprep.mubr.bf16.mxu0 0
    %311 = vmatmul.mubr.bf16.gmra.mrb[0].mxu0 %v176
    %v312 = vpop.f32.mrb[0].mxu0
    %v313 = vadd.f32 0.0, %v312
    %v314 = vpop.f32.mrb[0].mxu0
    %v315 = vpop.f32.mrb[0].mxu0
    %v316 = vadd.f32 0.0, %v315
    %v317 = vpop.f32.mrb[0].mxu0
    %318 = vmatprep.mubr.bf16.mxu0 0
    %319 = vmatmul.mubr.bf16.gmra.mrb[0].mxu0 %v179
    %v320 = vpop.f32.mrb[0].mxu0
    %v321 = vadd.f32 0.0, %v320
    %v322 = vpop.f32.mrb[0].mxu0
    %v323 = vpop.f32.mrb[0].mxu0
    %v324 = vadd.f32 0.0, %v323
    %v325 = vpop.f32.mrb[0].mxu0
    %326 = vmatprep.mubr.bf16.mxu0 0
    %327 = vmatmul.mubr.bf16.gmra.mrb[0].mxu0 %v182
    %v328 = vpop.f32.mrb[0].mxu0
    %v329 = vadd.f32 0.0, %v328
    %v330 = vpop.f32.mrb[0].mxu0
    %v331 = vpop.f32.mrb[0].mxu0
    %v332 = vadd.f32 0.0, %v331
    %v333 = vpop.f32.mrb[0].mxu0
    %334 = vmatprep.mubr.bf16.mxu0 0
    %335 = vmatmul.mubr.bf16.gmra.mrb[0].mxu0 %v185
    %v336 = vpop.f32.mrb[0].mxu0
    %v337 = vadd.f32 0.0, %v336
    %v338 = vpop.f32.mrb[0].mxu0
    %v339 = vpop.f32.mrb[0].mxu0
    %v340 = vadd.f32 0.0, %v339
    %v341 = vpop.f32.mrb[0].mxu0
    %342 = vmatprep.mubr.bf16.mxu0 0
    %343 = vmatmul.mubr.bf16.gmra.mrb[0].mxu0 %v188
    %v344 = vpop.f32.mrb[0].mxu0
    %v345 = vadd.f32 0.0, %v344
    %v346 = vpop.f32.mrb[0].mxu0
    %v347 = vpop.f32.mrb[0].mxu0
    %v348 = vadd.f32 0.0, %v347
    %v349 = vpop.f32.mrb[0].mxu0
    %350 = vdwg.mxu0
    %v351 = vpack.c.bf16 %v228, %v225
    %v352 = vpack.c.bf16 %v236, %v233
    %v353 = vpack.c.bf16 %v244, %v241
    %v354 = vpack.c.bf16 %v252, %v249
    %v355 = vpack.c.bf16 %v260, %v257
    %v356 = vpack.c.bf16 %v268, %v265
    %v357 = vpack.c.bf16 %v276, %v273
    %v358 = vpack.c.bf16 %v284, %v281
    %v359 = vpack.c.bf16 %v292, %v289
    %v360 = vpack.c.bf16 %v300, %v297
    %v361 = vpack.c.bf16 %v308, %v305
    %v362 = vpack.c.bf16 %v316, %v313
    %v363 = vpack.c.bf16 %v324, %v321
    %v364 = vpack.c.bf16 %v332, %v329
    %v365 = vpack.c.bf16 %v340, %v337
    %v366 = vpack.c.bf16 %v348, %v345
    %v383 = vunpack.c.l.b16 %v351
    %v384 = vunpack.c.h.b16 %v351
    %v385 = vunpack.c.l.b16 %v352
    %v386 = vunpack.c.h.b16 %v352
    %v387 = vunpack.c.l.b16 %v353
    %v388 = vunpack.c.h.b16 %v353
    %v389 = vunpack.c.l.b16 %v354
    %v390 = vunpack.c.h.b16 %v354
    %v391 = vunpack.c.l.b16 %v355
    %v392 = vunpack.c.h.b16 %v355
    %v393 = vunpack.c.l.b16 %v356
    %v394 = vunpack.c.h.b16 %v356
    %v395 = vunpack.c.l.b16 %v357
    %v396 = vunpack.c.h.b16 %v357
    %v397 = vunpack.c.l.b16 %v358
    %v398 = vunpack.c.h.b16 %v358
    %v399 = vunpack.c.l.b16 %v359
    %v400 = vunpack.c.h.b16 %v359
    %v401 = vunpack.c.l.b16 %v360
    %v402 = vunpack.c.h.b16 %v360
    %v403 = vunpack.c.l.b16 %v361
    %v404 = vunpack.c.h.b16 %v361
    %v405 = vunpack.c.l.b16 %v362
    %v406 = vunpack.c.h.b16 %v362
    %v407 = vunpack.c.l.b16 %v363
    %v408 = vunpack.c.h.b16 %v363
    %v409 = vunpack.c.l.b16 %v364
    %v410 = vunpack.c.h.b16 %v364
    %v411 = vunpack.c.l.b16 %v365
    %v412 = vunpack.c.h.b16 %v365
    %v413 = vunpack.c.l.b16 %v366
    %v414 = vunpack.c.h.b16 %v366
    %v415 = vpack.c.b16 %v383, %v383
    %v416 = vpack.c.b16 %v384, %v384
    %v417 = vpack.c.b16 %v385, %v385
    %v418 = vpack.c.b16 %v386, %v386
    %v419 = vpack.c.b16 %v387, %v387
    %v420 = vpack.c.b16 %v388, %v388
    %v421 = vpack.c.b16 %v389, %v389
    %v422 = vpack.c.b16 %v390, %v390
    %v423 = vpack.c.b16 %v391, %v391
    %v424 = vpack.c.b16 %v392, %v392
    %v425 = vpack.c.b16 %v393, %v393
    %v426 = vpack.c.b16 %v394, %v394
    %v427 = vpack.c.b16 %v395, %v395
    %v428 = vpack.c.b16 %v396, %v396
    %v429 = vpack.c.b16 %v397, %v397
    %v430 = vpack.c.b16 %v398, %v398
    %v431 = vpack.c.b16 %v399, %v399
    %v432 = vpack.c.b16 %v400, %v400
    %v433 = vpack.c.b16 %v401, %v401
    %v434 = vpack.c.b16 %v402, %v402
    %v435 = vpack.c.b16 %v403, %v403
    %v436 = vpack.c.b16 %v404, %v404
    %v437 = vpack.c.b16 %v405, %v405
    %v438 = vpack.c.b16 %v406, %v406
    %v439 = vpack.c.b16 %v407, %v407
    %v440 = vpack.c.b16 %v408, %v408
    %v441 = vpack.c.b16 %v409, %v409
    %v442 = vpack.c.b16 %v410, %v410
    %v443 = vpack.c.b16 %v411, %v411
    %v444 = vpack.c.b16 %v412, %v412
    %v445 = vpack.c.b16 %v413, %v413
    %v446 = vpack.c.b16 %v414, %v414
    %479 = vst [vmem:[#allocation2] sm:$0xf] %v415
    %480 = vst [vmem:[#allocation2 + $0x4] sm:$0xf] %v416
    %481 = vst [vmem:[#allocation2 + $0x8] sm:$0xf] %v417
    %482 = vst [vmem:[#allocation2 + $0xc] sm:$0xf] %v418
    %483 = vst [vmem:[#allocation2 + $0x10] sm:$0xf] %v419
    %484 = vst [vmem:[#allocation2 + $0x14] sm:$0xf] %v420
    %485 = vst [vmem:[#allocation2 + $0x18] sm:$0xf] %v421
    %486 = vst [vmem:[#allocation2 + $0x1c] sm:$0xf] %v422
    %487 = vst [vmem:[#allocation2 + $0x20] sm:$0xf] %v423
    %488 = vst [vmem:[#allocation2 + $0x24] sm:$0xf] %v424
    %489 = vst [vmem:[#allocation2 + $0x28] sm:$0xf] %v425
    %490 = vst [vmem:[#allocation2 + $0x2c] sm:$0xf] %v426
    %491 = vst [vmem:[#allocation2 + $0x30] sm:$0xf] %v427
    %492 = vst [vmem:[#allocation2 + $0x34] sm:$0xf] %v428
    %493 = vst [vmem:[#allocation2 + $0x38] sm:$0xf] %v429
    %494 = vst [vmem:[#allocation2 + $0x3c] sm:$0xf] %v430
    %495 = vst [vmem:[#allocation2 + $0x40] sm:$0xf] %v431
    %496 = vst [vmem:[#allocation2 + $0x44] sm:$0xf] %v432
    %497 = vst [vmem:[#allocation2 + $0x48] sm:$0xf] %v433
    %498 = vst [vmem:[#allocation2 + $0x4c] sm:$0xf] %v434
    %499 = vst [vmem:[#allocation2 + $0x50] sm:$0xf] %v435
    %500 = vst [vmem:[#allocation2 + $0x54] sm:$0xf] %v436
    %501 = vst [vmem:[#allocation2 + $0x58] sm:$0xf] %v437
    %502 = vst [vmem:[#allocation2 + $0x5c] sm:$0xf] %v438
    %503 = vst [vmem:[#allocation2 + $0x60] sm:$0xf] %v439
    %504 = vst [vmem:[#allocation2 + $0x64] sm:$0xf] %v440
    %505 = vst [vmem:[#allocation2 + $0x68] sm:$0xf] %v441
    %506 = vst [vmem:[#allocation2 + $0x6c] sm:$0xf] %v442
    %507 = vst [vmem:[#allocation2 + $0x70] sm:$0xf] %v443
    %508 = vst [vmem:[#allocation2 + $0x74] sm:$0xf] %v444
    %509 = vst [vmem:[#allocation2 + $0x78] sm:$0xf] %v445
    %510 = vst [vmem:[#allocation2 + $0x7c] sm:$0xf] %v446
    // Predicated region
    $region10: #{tpu_custom_call.1} parent=1 // pred_check
      _
    $region11: #{tpu_custom_call.1} parent=1 // pred_check_branch
      %512 = sbr.rel (0) target = $region13
    $region12: #{tpu_custom_call.1} parent=1 // pred_region
      %s514 = ssub.s32 2048, 2048
      %515 = vsyncadd [#allocation3], %s514
      %s516 = sshll.u32 [#allocation2], 4
      %s517 = int_to_ptr.vmem [resolvable:$true] %s516
      %522 = dma.vmem_to_hbm [thread:$0]  %s517, 2048, %s2, [#allocation3], 64, 64, 4
    $region13: #{tpu_custom_call.1} parent=1 // pred_fallthru
      _
    // Predicated region
    $region14: #{tpu_custom_call.1} parent=1 // pred_check
      _
    $region15: #{tpu_custom_call.1} parent=1 // pred_check_branch
      %524 = sbr.rel (0) target = $region17
    $region16: #{tpu_custom_call.1} parent=1 // pred_region
      %525 = dma.done [#allocation3], 2048
    $region17: #{tpu_custom_call.1} parent=1 // pred_fallthru
      _
    %526 = vsyncpa [#allocation3], 1

</llo_original>
